<compile_context>
chip_gen: v7x
topology: tpu7x:2x2x1
jax: 0.10.0
libtpu: 0.0.40
codegen_flags: <defaults>
</compile_context>

<pallas_src>
import functools

import jax
import jax.numpy as jnp
from jax import lax
from jax.experimental import pallas as pl
from jax.experimental.pallas import tpu as pltpu

ALPHA = 0.25  # SimMaxLoss(alpha=0.25), reduction='mean' (no learnable params)


def _simmax_kernel(xn_ref, out_ref, s_ref, *, alpha, block_rows, chunk):
    i = pl.program_id(0)
    tm = block_rows
    t = chunk
    n = xn_ref.shape[0]
    n_c = n // t

    row0 = pl.multiple_of(i * tm, tm)
    qb = xn_ref[pl.ds(row0, tm), :]                     # [TM, C] query rows

    # ---- Stage 1: similarity row-block, computed ONCE per grid step ----------
    # s_ref[c] = clamp(qb @ xn[c*T:(c+1)*T].T)  as a [TM, T] tile.
    @pl.loop(0, n_c)
    def _(c):
        c0 = pl.multiple_of(c * t, t)
        keys = xn_ref[pl.ds(c0, t), :]                  # [T, C] (sublane slice)
        s = lax.dot_general(qb, keys, (((1,), (1,)), ((), ())),
                            preferred_element_type=jnp.float32)  # [TM, T]
        s_ref[c] = jnp.clip(s, 0.0005, 0.9995)

    # Hoisted iotas:  k_idx < j_idx  <=>  (k_base - j_base) < (jc - kc) * T
    j_base = lax.broadcasted_iota(jnp.int32, (1, t, 1), 1)   # sublane iota
    k_base = lax.broadcasted_iota(jnp.int32, (1, 1, t), 2)   # lane iota
    idx_diff = k_base - j_base                               # [1, T, T]

    # ---- Stage 2: stable-descending-sort rank via counting -------------------
    def j_body(jc, acc):                                # acc: (1, 1) f32 partial
        s_j = s_ref[jc]                                 # [TM, T]
        l_j = -jnp.log(s_j)                             # > 0 always: ReLU is dead
        s_j3 = s_j[:, :, None]                          # [TM, T, 1]

        def k_body(kc, cnt):                            # cnt: [TM, T] f32
            s_k = s_ref[kc]                             # [TM, T]
            s_k3 = s_k[:, None, :]                      # [TM, 1, T]
            lt = idx_diff < (jc - kc) * t               # [1, T, T]: k_idx < j_idx
            gt = s_k3 > s_j3
            tie = jnp.logical_and(s_k3 == s_j3, lt)
            # stable-descending-sort rank contribution from this k chunk
            return cnt + jnp.sum(
                jnp.where(jnp.logical_or(gt, tie), 1.0, 0.0), axis=2)

        cnt = lax.fori_loop(0, n_c, k_body,
                            jnp.zeros((tm, t), jnp.float32))
        rank = cnt - 1.0                                # torch: rank = rank - 1
        w = jnp.exp(-rank * alpha)
        return acc + jnp.sum(l_j * w, keepdims=True)

    partial = lax.fori_loop(0, n_c, j_body, jnp.zeros((1, 1), jnp.float32))
    # Lane-padded per-block partial sum; reduced & normalized in the wrapper.
    out_ref[...] = jnp.broadcast_to(partial[:, :, None], (1, 8, 128))


def sim_max_loss(x, alpha=ALPHA, block_rows=64, chunk=128):
    """x: [N, C]. Returns scalar float32 loss (matches SimMaxLoss.forward)."""
    n, c = x.shape

    def _fit(pref):
        tt = min(pref, n)
        while n % tt != 0:      # largest divisor of n not exceeding the preference
            tt -= 1
        return tt

    tm, t = _fit(block_rows), _fit(chunk)

    # F.normalize(dim=1) hoisted out of the grid loop (computed exactly once).
    xn = x.astype(jnp.float32)
    xn = xn / jnp.maximum(jnp.sqrt(jnp.sum(xn * xn, axis=1, keepdims=True)), 1e-12)

    grid = n // tm
    kernel = functools.partial(_simmax_kernel, alpha=alpha, block_rows=tm, chunk=t)
    partials = pl.pallas_call(
        kernel,
        out_shape=jax.ShapeDtypeStruct((grid, 8, 128), jnp.float32),
        grid_spec=pltpu.PrefetchScalarGridSpec(
            num_scalar_prefetch=0,
            grid=(grid,),
            # Single resident normalized matrix (constant block index).
            # TODO(synk): collapse this constant-index input to a single buffer
            # (pl.Buffered(1) / pl.ANY + one copy) to free N*C*4 B of VMEM.
            in_specs=[pl.BlockSpec((n, c), lambda i: (0, 0))],
            out_specs=pl.BlockSpec((1, 8, 128), lambda i: (i, 0, 0)),
            scratch_shapes=[pltpu.VMEM((n // t, tm, t), jnp.float32)],
        ),
        compiler_params=pltpu.CompilerParams(
            dimension_semantics=("parallel",)),   # megacore-shardable on v7x
    )(xn)
    return jnp.sum(partials[:, 0, 0]) / jnp.float32(n * n)


def _ref_sim_max_loss(x, alpha=ALPHA):
    # Pure-JAX reference mirroring the PyTorch module (stable sort semantics).
    xn = x / jnp.maximum(jnp.linalg.norm(x, axis=1, keepdims=True), 1e-12)
    sim = jnp.clip(xn @ xn.T, 0.0005, 0.9995)
    loss = -jnp.log(sim)
    loss = jnp.where(loss < 0.0, 0.0, loss)
    indices = jnp.argsort(-sim, axis=1)           # descending, stable
    rank = jnp.argsort(indices, axis=1) - 1
    w = jnp.exp(-rank.astype(jnp.float32) * alpha)
    return jnp.mean(loss * w)


if __name__ == "__main__":
    key = jax.random.PRNGKey(0)
    x = jax.random.normal(key, (16, 32), dtype=jnp.float32)  # embedded_bg [N, C]

    out = sim_max_loss(x)
    out = jax.block_until_ready(out)

    ref = _ref_sim_max_loss(x)
    assert jnp.allclose(out, ref, rtol=1e-5, atol=1e-5), (float(out), float(ref))
    print("KERNEL_OK")
</pallas_src>

<mosaic_0001>
module attributes {stable_mosaic.version = 11 : i64} {
  func.func @_simmax_kernel(%arg0: i32, %arg1: memref<16x32xf32, #tpu.memory_space<vmem>>, %arg2: memref<1x8x128xf32, #tpu.memory_space<vmem>>, %arg3: memref<1x16x16xf32, #tpu.memory_space<vmem>>) attributes {dimension_semantics = [#tpu.dimension_semantics<parallel>], iteration_bounds = array<i64: 1>, scalar_prefetch = 0 : i64, scratch_operands = 1 : i64, tpu.core_type = #tpu.core_type<tc>, window_params = [{pipeline_mode = #tpu.pipeline_mode<synchronous>, transform_indices = @transform_0, window_bounds = array<i64: 16, 32>}, {transform_indices = @transform_1, window_bounds = array<i64: 1, 8, 128>}]} {
    %c16_i32 = arith.constant 16 : i32
    %0 = arith.muli %arg0, %c16_i32 : i32
    %1 = tpu.assume_multiple %0, 16 : i32
    %2 = arith.index_cast %1 : i32 to index
    %c0 = arith.constant 0 : index
    %3 = vector.load %arg1[%2, %c0] : memref<16x32xf32, #tpu.memory_space<vmem>>, vector<16x32xf32>
    %c0_i32 = arith.constant 0 : i32
    %c1_i32 = arith.constant 1 : i32
    %4 = arith.muli %c0_i32, %c1_i32 : i32
    %c0_i32_0 = arith.constant 0 : i32
    %5 = arith.addi %c0_i32_0, %4 : i32
    %c16_i32_1 = arith.constant 16 : i32
    %6 = arith.muli %5, %c16_i32_1 : i32
    %7 = tpu.assume_multiple %6, 16 : i32
    %8 = arith.index_cast %7 : i32 to index
    %c0_2 = arith.constant 0 : index
    %9 = vector.load %arg1[%8, %c0_2] : memref<16x32xf32, #tpu.memory_space<vmem>>, vector<16x32xf32>
    %cst = arith.constant dense<0.000000e+00> : vector<16x16xf32>
    %10 = tpu.matmul %3, %9, %cst {dimension_numbers = #tpu.dot_dimension_numbers<[1], [1], [0], [0], [0, 0, 1, 0], [], []>} : vector<16x32xf32>, vector<16x32xf32>, vector<16x16xf32> -> vector<16x16xf32>
    %cst_3 = arith.constant 5.000000e-04 : f32
    %cst_4 = arith.constant 0.999499976 : f32
    %11 = vector.broadcast %cst_3 : f32 to vector<16x16xf32>
    %12 = arith.maximumf %11, %10 : vector<16x16xf32>
    %13 = vector.broadcast %cst_4 : f32 to vector<16x16xf32>
    %14 = arith.minimumf %13, %12 : vector<16x16xf32>
    %15 = arith.index_cast %5 : i32 to index
    %c0_5 = arith.constant 0 : index
    %c0_6 = arith.constant 0 : index
    %16 = vector.load %arg3[%15, %c0_5, %c0_6] : memref<1x16x16xf32, #tpu.memory_space<vmem>>, vector<1x16x16xf32>
    %17 = vector.shape_cast %16 : vector<1x16x16xf32> to vector<16x16xf32>
    %18 = vector.shape_cast %14 : vector<16x16xf32> to vector<1x16x16xf32>
    tpu.vector_store %arg3[%15, %c0_5, %c0_6], %18 {strides = array<i32>} : memref<1x16x16xf32, #tpu.memory_space<vmem>>, vector<1x16x16xf32>,
    %c1_i32_7 = arith.constant 1 : i32
    %19 = tpu.iota {dimensions = array<i32: 1>} : vector<1x16x1xi32>
    %20 = tpu.iota {dimensions = array<i32: 2>} : vector<1x1x16xi32>
    %21 = vector.broadcast %20 : vector<1x1x16xi32> to vector<1x16x16xi32>
    %22 = vector.broadcast %19 : vector<1x16x1xi32> to vector<1x16x16xi32>
    %23 = arith.subi %21, %22 : vector<1x16x16xi32>
    %cst_8 = arith.constant 0.000000e+00 : f32
    %24 = vector.broadcast %cst_8 : f32 to vector<1x1xf32>
    %c0_i32_9 = arith.constant 0 : i32
    %25 = arith.index_cast %c0_i32_9 : i32 to index
    %c0_10 = arith.constant 0 : index
    %c0_11 = arith.constant 0 : index
    %26 = vector.load %arg3[%25, %c0_10, %c0_11] : memref<1x16x16xf32, #tpu.memory_space<vmem>>, vector<1x16x16xf32>
    %27 = vector.shape_cast %26 : vector<1x16x16xf32> to vector<16x16xf32>
    %28 = math.log %27 : vector<16x16xf32>
    %cst_12 = arith.constant 0.000000e+00 : f32
    %29 = vector.broadcast %cst_12 : f32 to vector<16x16xf32>
    %30 = arith.subf %29, %28 : vector<16x16xf32>
    %31 = vector.shape_cast %27 : vector<16x16xf32> to vector<16x16x1xf32>
    %cst_13 = arith.constant 0.000000e+00 : f32
    %32 = vector.broadcast %cst_13 : f32 to vector<16x16xf32>
    %c0_i32_14 = arith.constant 0 : i32
    %33 = arith.index_cast %c0_i32_14 : i32 to index
    %c0_15 = arith.constant 0 : index
    %c0_16 = arith.constant 0 : index
    %34 = vector.load %arg3[%33, %c0_15, %c0_16] : memref<1x16x16xf32, #tpu.memory_space<vmem>>, vector<1x16x16xf32>
    %35 = vector.shape_cast %34 : vector<1x16x16xf32> to vector<16x16xf32>
    %36 = vector.shape_cast %35 : vector<16x16xf32> to vector<16x1x16xf32>
    %37 = arith.subi %c0_i32_9, %c0_i32_14 : i32
    %c16_i32_17 = arith.constant 16 : i32
    %38 = arith.muli %37, %c16_i32_17 : i32
    %39 = vector.broadcast %38 : i32 to vector<1x16x16xi32>
    %40 = arith.cmpi slt, %23, %39 : vector<1x16x16xi32>
    %41 = vector.broadcast %36 : vector<16x1x16xf32> to vector<16x16x16xf32>
    %42 = vector.broadcast %31 : vector<16x16x1xf32> to vector<16x16x16xf32>
    %43 = arith.cmpf ogt, %41, %42 : vector<16x16x16xf32>
    %44 = vector.broadcast %36 : vector<16x1x16xf32> to vector<16x16x16xf32>
    %45 = vector.broadcast %31 : vector<16x16x1xf32> to vector<16x16x16xf32>
    %46 = arith.cmpf oeq, %44, %45 : vector<16x16x16xf32>
    %47 = vector.broadcast %40 : vector<1x16x16xi1> to vector<16x16x16xi1>
    %48 = arith.andi %46, %47 : vector<16x16x16xi1>
    %49 = arith.ori %43, %48 : vector<16x16x16xi1>
    %cst_18 = arith.constant 1.000000e+00 : f32
    %cst_19 = arith.constant 0.000000e+00 : f32
    %50 = vector.broadcast %cst_18 : f32 to vector<16x16x16xf32>
    %51 = vector.broadcast %cst_19 : f32 to vector<16x16x16xf32>
    %52 = arith.select %49, %50, %51 : vector<16x16x16xi1>, vector<16x16x16xf32>
    %cst_20 = arith.constant dense<0.000000e+00> : vector<16x16xf32>
    %53 = vector.multi_reduction <add>, %52, %cst_20 [2] : vector<16x16x16xf32> to vector<16x16xf32>
    %54 = arith.addf %32, %53 : vector<16x16xf32>
    %c1_i32_21 = arith.constant 1 : i32
    %cst_22 = arith.constant 1.000000e+00 : f32
    %55 = vector.broadcast %cst_22 : f32 to vector<16x16xf32>
    %56 = arith.subf %54, %55 : vector<16x16xf32>
    %cst_23 = arith.constant 0.000000e+00 : f32
    %57 = vector.broadcast %cst_23 : f32 to vector<16x16xf32>
    %58 = arith.subf %57, %56 : vector<16x16xf32>
    %cst_24 = arith.constant 2.500000e-01 : f32
    %59 = vector.broadcast %cst_24 : f32 to vector<16x16xf32>
    %60 = arith.mulf %58, %59 : vector<16x16xf32>
    %61 = math.exp %60 : vector<16x16xf32>
    %62 = arith.mulf %30, %61 : vector<16x16xf32>
    %63 = vector.shape_cast %62 : vector<16x16xf32> to vector<1x16x16xf32>
    %cst_25 = arith.constant dense<0.000000e+00> : vector<1xf32>
    %64 = vector.multi_reduction <add>, %63, %cst_25 [1, 2] : vector<1x16x16xf32> to vector<1xf32>
    %65 = vector.shape_cast %64 : vector<1xf32> to vector<1x1x1xf32>
    %66 = vector.extract %65[0, 0, 0] : f32 from vector<1x1x1xf32>
    %67 = vector.broadcast %66 : f32 to vector<1x1xf32>
    %68 = arith.addf %24, %67 : vector<1x1xf32>
    %c1_i32_26 = arith.constant 1 : i32
    %69 = vector.shape_cast %68 : vector<1x1xf32> to vector<1x1x1xf32>
    %70 = vector.shape_cast %69 : vector<1x1x1xf32> to vector<1x1x1xf32>
    %71 = vector.broadcast %70 : vector<1x1x1xf32> to vector<1x8x128xf32>
    %c0_27 = arith.constant 0 : index
    %c0_28 = arith.constant 0 : index
    %c0_29 = arith.constant 0 : index
    %72 = vector.load %arg2[%c0_27, %c0_28, %c0_29] : memref<1x8x128xf32, #tpu.memory_space<vmem>>, vector<1x8x128xf32>
    tpu.vector_store %arg2[%c0_27, %c0_28, %c0_29], %71 {strides = array<i32>} : memref<1x8x128xf32, #tpu.memory_space<vmem>>, vector<1x8x128xf32>,
    return
  }
  func.func @transform_0(%arg0: i32) -> (i32, i32) {
    %c0_i32 = arith.constant 0 : i32
    %c0_i32_0 = arith.constant 0 : i32
    %c0_i32_1 = arith.constant 0 : i32
    return %c0_i32, %c0_i32_0 : i32, i32
  }
  func.func @transform_1(%arg0: i32) -> (i32, i32, i32) {
    %c0_i32 = arith.constant 0 : i32
    %c0_i32_0 = arith.constant 0 : i32
    %c0_i32_1 = arith.constant 0 : i32
    return %arg0, %c0_i32, %c0_i32_0 : i32, i32, i32
  }
}

</mosaic_0001>

<llo_original>
// kernel: tpu_custom_call.1
$region0: #{tpu_custom_call.1}
  #allocation0 [shape = 'u32[]', space=smem, size = 0x4, offset = 0x4, fixed_abs, tag = 'smem constant byte address 0x4 - core index']
  #allocation1 [shape = 'u32[144,128]{1,0:T(1,128)}', space=vmem, size = 0x12000, scoped, tag = 'internal scratch']
  #allocation2 [shape = 'f32[1,16,16]{2,1,0:T(8,128)}', space=vmem, size = 0x2000, scoped, tag = 'scratch operand']
  %s0 = inlined_call_operand.hbm [shape: f32[16,32], index: 0, kind: input, shape index: {}]
  %s1 = inlined_call_operand.hbm [shape: f32[1,8,128], index: 1, kind: output, shape index: {}]
  %s2 = sld [smem:[#allocation0]]
  $region18: #{tpu_custom_call.1} parent=0
    _
  %s4 = ssub.s32 1, %s2
  %s5 = scalar_select 0, %s4, %s2
  $region1: #{tpu_custom_call.1} parent=0
    #allocation3 [shape = 'u8[8192]{0}', space=vmem, size = 0x2000, scoped, tag = 'input window, operand 0, single buffered']
    #allocation4 [shape = 's32[1]{0}', space=sflag, size = 0x4, scoped, tag = 'scoped memory for tpu_custom_call.1']
    #allocation5 [shape = 's32[1]{0}', space=sflag, size = 0x4, scoped, tag = 'scoped memory for tpu_custom_call.1']
    #allocation6 [shape = 'u8[4096]{0}', space=vmem, size = 0x1000, scoped, tag = 'output window, operand 0, single buffered']
    %6 = vsyncpa [#allocation4], 0
    %7 = vsyncpa [#allocation5], 0
    // Predicated region
    $region2: #{tpu_custom_call.1} parent=1 // pred_check
      _
    $region3: #{tpu_custom_call.1} parent=1 // pred_check_branch
      %9 = sbr.rel (0) target = $region5
    $region4: #{tpu_custom_call.1} parent=1 // pred_region
      %s11 = ssub.s32 256, 256
      %12 = vsyncadd [#allocation4], %s11
      %s13 = sshll.u32 [#allocation3], 4
      %s14 = int_to_ptr.vmem [resolvable:$true] %s13
      %19 = dma.hbm_to_vmem [thread:$0]  %s0, 256, %s14, [#allocation4], 128, 128, 8
    $region5: #{tpu_custom_call.1} parent=1 // pred_fallthru
      _
    // Predicated region
    $region6: #{tpu_custom_call.1} parent=1 // pred_check
      _
    $region7: #{tpu_custom_call.1} parent=1 // pred_check_branch
      %21 = sbr.rel (0) target = $region9
    $region8: #{tpu_custom_call.1} parent=1 // pred_region
      %22 = dma.done [#allocation4], 256
    $region9: #{tpu_custom_call.1} parent=1 // pred_fallthru
      _
    %s23 = smul.u32 0, 16
    %s24 = scalar_lea.vmem [#allocation3], %s23
    %v25 = vld [vmem:[%s24] sm:$0xff]
    %v26 = vld [vmem:[%s24 + $0x8] sm:$0xff]
    %v27 = vld [vmem:[#allocation3] sm:$0xff]
    %v28 = vld [vmem:[#allocation3 + $0x8] sm:$0xff]
    %vm29 = vcmask 261120
    %v31 = vsel %vm29, %v25, 0
    %v34 = vsel %vm29, %v26, 0
    %v37 = vsel %vm29, %v27, 0
    %v40 = vsel %vm29, %v28, 0
    %42 = vmatprep.subr.mxu0 0.0
    %43 = vmatpush1.xpose.msra.mxu0 %v37
    %44 = vmatprep.subr.mxu0 0.0
    %45 = vmatpush1.xpose.msra.mxu0 %v40
    %46 = vmatprep.subr.mxu0 0.0
    %47 = vmatpush1.xpose.msra.mxu0 0.0
    %48 = vmatprep.subr.mxu0 0.0
    %49 = vmatpush1.xpose.msra.mxu0 0.0
    %50 = vmatprep.subr.mxu0 0.0
    %51 = vmatpush1.xpose.msra.mxu0 0.0
    %52 = vmatprep.subr.mxu0 0.0
    %53 = vmatpush1.xpose.msra.mxu0 0.0
    %54 = vmatprep.subr.mxu0 0.0
    %55 = vmatpush1.xpose.msra.mxu0 0.0
    %56 = vmatprep.subr.mxu0 0.0
    %57 = vmatpush1.xpose.msra.mxu0 0.0
    %58 = vmatprep.subr.mxu0 0.0
    %59 = vmatpush1.xpose.msra.mxu0 0.0
    %60 = vmatprep.subr.mxu0 0.0
    %61 = vmatpush1.xpose.msra.mxu0 0.0
    %62 = vmatprep.subr.mxu0 0.0
    %63 = vmatpush1.xpose.msra.mxu0 0.0
    %64 = vmatprep.subr.mxu0 0.0
    %65 = vmatpush1.xpose.msra.mxu0 0.0
    %66 = vmatprep.subr.mxu0 0.0
    %67 = vmatpush1.xpose.msra.mxu0 0.0
    %68 = vmatprep.subr.mxu0 0.0
    %69 = vmatpush1.xpose.msra.mxu0 0.0
    %70 = vmatprep.subr.mxu0 0.0
    %71 = vmatpush1.xpose.msra.mxu0 0.0
    %72 = vmatprep.subr.mxu0 0.0
    %73 = vmatpush1.xpose.msra.mxu0 0.0
    %74 = vmatprep.subr.mxu0 0.0
    %75 = vmatpush1.xpose.msra.mxu0 0.0
    %76 = vmatprep.subr.mxu0 0.0
    %77 = vmatpush1.xpose.msra.mxu0 0.0
    %78 = vmatprep.subr.mxu0 0.0
    %79 = vmatpush1.xpose.msra.mxu0 0.0
    %80 = vmatprep.subr.mxu0 0.0
    %81 = vmatpush1.xpose.msra.mxu0 0.0
    %82 = vmatprep.subr.mxu0 0.0
    %83 = vmatpush1.xpose.msra.mxu0 0.0
    %84 = vmatprep.subr.mxu0 0.0
    %85 = vmatpush1.xpose.msra.mxu0 0.0
    %86 = vmatprep.subr.mxu0 0.0
    %87 = vmatpush1.xpose.msra.mxu0 0.0
    %88 = vmatprep.subr.mxu0 0.0
    %89 = vmatpush1.xpose.msra.mxu0 0.0
    %90 = vmatprep.subr.mxu0 0.0
    %91 = vmatpush1.xpose.msra.mxu0 0.0
    %92 = vmatprep.subr.mxu0 0.0
    %93 = vmatpush1.xpose.msra.mxu0 0.0
    %94 = vmatprep.subr.mxu0 0.0
    %95 = vmatpush1.xpose.msra.mxu0 0.0
    %96 = vmatprep.subr.mxu0 0.0
    %97 = vmatpush1.xpose.msra.mxu0 0.0
    %98 = vmatprep.subr.mxu0 0.0
    %99 = vmatpush1.xpose.msra.mxu0 0.0
    %100 = vmatprep.subr.mxu0 0.0
    %101 = vmatpush1.xpose.msra.mxu0 0.0
    %102 = vmatprep.subr.mxu0 0.0
    %103 = vmatpush1.xpose.msra.mxu0 0.0
    %104 = vmatprep.subr.mxu0 0.0
    %105 = vmatpush1.xpose.msra.mxu0 0.0
    %106 = vmatprep.mubr.f32.mxu0 0.0
    %107 = vmatmul.mubr.f32.gmra.mrb[0].mxu0 %v31
    %v108 = vpop.f32.mrb[0].mxu0
    %v109 = vadd.f32 0.0, %v108
    %v110 = vpop.f32.mrb[0].mxu0
    %111 = vmatprep.mubr.f32.mxu0 0.0
    %112 = vmatmul.mubr.f32.gmra.mrb[0].mxu0 %v34
    %v113 = vpop.f32.mrb[0].mxu0
    %v114 = vadd.f32 0.0, %v113
    %v115 = vpop.f32.mrb[0].mxu0
    %116 = vdwg.mxu0
    %v117 = vmax.f32 %v109, 0.0005
    %v118 = vmax.f32 %v114, 0.0005
    %v119 = vmin.f32 %v117, 0.9995
    %v120 = vmin.f32 %v118, 0.9995
    %vm121 = vcmask 130048
    %122 = vst.msk [vmem:[#allocation2] sm:$0xff] %vm121, %v119
    %123 = vst.msk [vmem:[#allocation2 + $0x8] sm:$0xff] %vm121, %v120
    %v124 = vlaneseq
    %v125 = vshrl.u32 %v124, 7
    %v126 = vadd.s32 %v125, 8
    %v127 = vlaneseq
    %v128 = vand.u32 %v127, 127
    %v129 = vsub.s32 %v128, %v125
    %v130 = vsub.s32 %v128, %v126
    %v131 = vld [vmem:[#allocation2] sm:$0xff]
    %v132 = vld [vmem:[#allocation2 + $0x8] sm:$0xff]
    %v133 = vlog2.pop %v131
    %v134 = vmul.f32 %v133, 0.6931472
    %v135 = vlog2.pop %v132
    %v136 = vmul.f32 %v135, 0.6931472
    %v137 = vsub.f32 0.0, %v134
    %v138 = vsub.f32 0.0, %v136
    %v139 = vlaneseq
    %v140 = vshrl.u32 %v139, 7
    %v141 = vsub.s32 0, %v140
    %v142 = vrot.slane %v131, %v141
    %144 = vbcast.lane.b32.xlu0 %v142, 256
    %v145 = vpop.permute.xlu0 %144
    %s147 = sor.u32 256, 8
    %148 = vbcast.lane.b32.xlu0 %v142, %s147
    %v149 = vpop.permute.xlu0 %148
    %v150 = vlaneseq
    %v151 = vshrl.u32 %v150, 7
    %v152 = vsub.s32 1, %v151
    %v153 = vrot.slane %v131, %v152
    %155 = vbcast.lane.b32.xlu0 %v153, 256
    %v156 = vpop.permute.xlu0 %155
    %s158 = sor.u32 256, 8
    %159 = vbcast.lane.b32.xlu0 %v153, %s158
    %v160 = vpop.permute.xlu0 %159
    %v161 = vlaneseq
    %v162 = vshrl.u32 %v161, 7
    %v163 = vsub.s32 2, %v162
    %v164 = vrot.slane %v131, %v163
    %166 = vbcast.lane.b32.xlu0 %v164, 256
    %v167 = vpop.permute.xlu0 %166
    %s169 = sor.u32 256, 8
    %170 = vbcast.lane.b32.xlu0 %v164, %s169
    %v171 = vpop.permute.xlu0 %170
    %v172 = vlaneseq
    %v173 = vshrl.u32 %v172, 7
    %v174 = vsub.s32 3, %v173
    %v175 = vrot.slane %v131, %v174
    %177 = vbcast.lane.b32.xlu0 %v175, 256
    %v178 = vpop.permute.xlu0 %177
    %s180 = sor.u32 256, 8
    %181 = vbcast.lane.b32.xlu0 %v175, %s180
    %v182 = vpop.permute.xlu0 %181
    %v183 = vlaneseq
    %v184 = vshrl.u32 %v183, 7
    %v185 = vsub.s32 4, %v184
    %v186 = vrot.slane %v131, %v185
    %188 = vbcast.lane.b32.xlu0 %v186, 256
    %v189 = vpop.permute.xlu0 %188
    %s191 = sor.u32 256, 8
    %192 = vbcast.lane.b32.xlu0 %v186, %s191
    %v193 = vpop.permute.xlu0 %192
    %v194 = vlaneseq
    %v195 = vshrl.u32 %v194, 7
    %v196 = vsub.s32 5, %v195
    %v197 = vrot.slane %v131, %v196
    %199 = vbcast.lane.b32.xlu0 %v197, 256
    %v200 = vpop.permute.xlu0 %199
    %s202 = sor.u32 256, 8
    %203 = vbcast.lane.b32.xlu0 %v197, %s202
    %v204 = vpop.permute.xlu0 %203
    %v205 = vlaneseq
    %v206 = vshrl.u32 %v205, 7
    %v207 = vsub.s32 6, %v206
    %v208 = vrot.slane %v131, %v207
    %210 = vbcast.lane.b32.xlu0 %v208, 256
    %v211 = vpop.permute.xlu0 %210
    %s213 = sor.u32 256, 8
    %214 = vbcast.lane.b32.xlu0 %v208, %s213
    %v215 = vpop.permute.xlu0 %214
    %v216 = vlaneseq
    %v217 = vshrl.u32 %v216, 7
    %v218 = vsub.s32 7, %v217
    %v219 = vrot.slane %v131, %v218
    %221 = vbcast.lane.b32.xlu0 %v219, 256
    %v222 = vpop.permute.xlu0 %221
    %s224 = sor.u32 256, 8
    %225 = vbcast.lane.b32.xlu0 %v219, %s224
    %v226 = vpop.permute.xlu0 %225
    %v227 = vlaneseq
    %v228 = vshrl.u32 %v227, 7
    %v229 = vsub.s32 0, %v228
    %v230 = vrot.slane %v132, %v229
    %232 = vbcast.lane.b32.xlu0 %v230, 256
    %v233 = vpop.permute.xlu0 %232
    %s235 = sor.u32 256, 8
    %236 = vbcast.lane.b32.xlu0 %v230, %s235
    %v237 = vpop.permute.xlu0 %236
    %v238 = vlaneseq
    %v239 = vshrl.u32 %v238, 7
    %v240 = vsub.s32 1, %v239
    %v241 = vrot.slane %v132, %v240
    %243 = vbcast.lane.b32.xlu0 %v241, 256
    %v244 = vpop.permute.xlu0 %243
    %s246 = sor.u32 256, 8
    %247 = vbcast.lane.b32.xlu0 %v241, %s246
    %v248 = vpop.permute.xlu0 %247
    %v249 = vlaneseq
    %v250 = vshrl.u32 %v249, 7
    %v251 = vsub.s32 2, %v250
    %v252 = vrot.slane %v132, %v251
    %254 = vbcast.lane.b32.xlu0 %v252, 256
    %v255 = vpop.permute.xlu0 %254
    %s257 = sor.u32 256, 8
    %258 = vbcast.lane.b32.xlu0 %v252, %s257
    %v259 = vpop.permute.xlu0 %258
    %v260 = vlaneseq
    %v261 = vshrl.u32 %v260, 7
    %v262 = vsub.s32 3, %v261
    %v263 = vrot.slane %v132, %v262
    %265 = vbcast.lane.b32.xlu0 %v263, 256
    %v266 = vpop.permute.xlu0 %265
    %s268 = sor.u32 256, 8
    %269 = vbcast.lane.b32.xlu0 %v263, %s268
    %v270 = vpop.permute.xlu0 %269
    %v271 = vlaneseq
    %v272 = vshrl.u32 %v271, 7
    %v273 = vsub.s32 4, %v272
    %v274 = vrot.slane %v132, %v273
    %276 = vbcast.lane.b32.xlu0 %v274, 256
    %v277 = vpop.permute.xlu0 %276
    %s279 = sor.u32 256, 8
    %280 = vbcast.lane.b32.xlu0 %v274, %s279
    %v281 = vpop.permute.xlu0 %280
    %v282 = vlaneseq
    %v283 = vshrl.u32 %v282, 7
    %v284 = vsub.s32 5, %v283
    %v285 = vrot.slane %v132, %v284
    %287 = vbcast.lane.b32.xlu0 %v285, 256
    %v288 = vpop.permute.xlu0 %287
    %s290 = sor.u32 256, 8
    %291 = vbcast.lane.b32.xlu0 %v285, %s290
    %v292 = vpop.permute.xlu0 %291
    %v293 = vlaneseq
    %v294 = vshrl.u32 %v293, 7
    %v295 = vsub.s32 6, %v294
    %v296 = vrot.slane %v132, %v295
    %298 = vbcast.lane.b32.xlu0 %v296, 256
    %v299 = vpop.permute.xlu0 %298
    %s301 = sor.u32 256, 8
    %302 = vbcast.lane.b32.xlu0 %v296, %s301
    %v303 = vpop.permute.xlu0 %302
    %v304 = vlaneseq
    %v305 = vshrl.u32 %v304, 7
    %v306 = vsub.s32 7, %v305
    %v307 = vrot.slane %v132, %v306
    %309 = vbcast.lane.b32.xlu0 %v307, 256
    %v310 = vpop.permute.xlu0 %309
    %s312 = sor.u32 256, 8
    %313 = vbcast.lane.b32.xlu0 %v307, %s312
    %v314 = vpop.permute.xlu0 %313
    %v317 = vcombine.high %v131, %v131
    %v319 = vunpack.c.l.s4 1966171168
    %v320 = vunpack.c.0.s8 %v319
    %v321 = vlaneseq
    %v322 = vshrl.u32 %v321, 7
    %v323 = vsub.s32 %v320, %v322
    %v324 = vrot.slane %v131, %v323
    %v326 = vunpack.c.l.s4 1966171168
    %v327 = vunpack.c.0.s8 %v326
    %v328 = vlaneseq
    %v329 = vshrl.u32 %v328, 7
    %v330 = vsub.s32 %v327, %v329
    %v331 = vrot.slane %v317, %v330
    %v332 = vcombine.high %v324, %v324
    %v333 = vcombine.high %v331, %v331
    %v335 = vunpack.c.l.s4 1966171168
    %v336 = vunpack.c.0.s8 %v335
    %v337 = vlaneseq
    %v338 = vshrl.u32 %v337, 7
    %v339 = vsub.s32 %v336, %v338
    %v340 = vrot.slane %v324, %v339
    %v342 = vunpack.c.l.s4 1966171168
    %v343 = vunpack.c.0.s8 %v342
    %v344 = vlaneseq
    %v345 = vshrl.u32 %v344, 7
    %v346 = vsub.s32 %v343, %v345
    %v347 = vrot.slane %v331, %v346
    %v349 = vunpack.c.l.s4 1966171168
    %v350 = vunpack.c.0.s8 %v349
    %v351 = vlaneseq
    %v352 = vshrl.u32 %v351, 7
    %v353 = vsub.s32 %v350, %v352
    %v354 = vrot.slane %v332, %v353
    %v356 = vunpack.c.l.s4 1966171168
    %v357 = vunpack.c.0.s8 %v356
    %v358 = vlaneseq
    %v359 = vshrl.u32 %v358, 7
    %v360 = vsub.s32 %v357, %v359
    %v361 = vrot.slane %v333, %v360
    %v362 = vcombine.high %v340, %v340
    %v363 = vcombine.high %v347, %v347
    %v364 = vcombine.high %v354, %v354
    %v365 = vcombine.high %v361, %v361
    %v366 = vcombine.high %v132, %v132
    %v368 = vunpack.c.l.s4 1966171168
    %v369 = vunpack.c.0.s8 %v368
    %v370 = vlaneseq
    %v371 = vshrl.u32 %v370, 7
    %v372 = vsub.s32 %v369, %v371
    %v373 = vrot.slane %v132, %v372
    %v375 = vunpack.c.l.s4 1966171168
    %v376 = vunpack.c.0.s8 %v375
    %v377 = vlaneseq
    %v378 = vshrl.u32 %v377, 7
    %v379 = vsub.s32 %v376, %v378
    %v380 = vrot.slane %v366, %v379
    %v381 = vcombine.high %v373, %v373
    %v382 = vcombine.high %v380, %v380
    %v384 = vunpack.c.l.s4 1966171168
    %v385 = vunpack.c.0.s8 %v384
    %v386 = vlaneseq
    %v387 = vshrl.u32 %v386, 7
    %v388 = vsub.s32 %v385, %v387
    %v389 = vrot.slane %v373, %v388
    %v391 = vunpack.c.l.s4 1966171168
    %v392 = vunpack.c.0.s8 %v391
    %v393 = vlaneseq
    %v394 = vshrl.u32 %v393, 7
    %v395 = vsub.s32 %v392, %v394
    %v396 = vrot.slane %v380, %v395
    %v398 = vunpack.c.l.s4 1966171168
    %v399 = vunpack.c.0.s8 %v398
    %v400 = vlaneseq
    %v401 = vshrl.u32 %v400, 7
    %v402 = vsub.s32 %v399, %v401
    %v403 = vrot.slane %v381, %v402
    %v405 = vunpack.c.l.s4 1966171168
    %v406 = vunpack.c.0.s8 %v405
    %v407 = vlaneseq
    %v408 = vshrl.u32 %v407, 7
    %v409 = vsub.s32 %v406, %v408
    %v410 = vrot.slane %v382, %v409
    %v411 = vcombine.high %v389, %v389
    %v412 = vcombine.high %v396, %v396
    %v413 = vcombine.high %v403, %v403
    %v414 = vcombine.high %v410, %v410
    %vm415 = vcmp.lt.s32.totalorder %v129, 0
    %vm416 = vcmp.lt.s32.totalorder %v130, 0
    %v417 = vlaneseq
    %v418 = vshrl.u32 %v417, 7
    %v419 = vsub.s32 0, %v418
    %v420 = vrot.slane %v340, %v419
    %v421 = vlaneseq
    %v422 = vshrl.u32 %v421, 7
    %v423 = vsub.s32 0, %v422
    %v424 = vrot.slane %v354, %v423
    %v425 = vlaneseq
    %v426 = vshrl.u32 %v425, 7
    %v427 = vsub.s32 0, %v426
    %v428 = vrot.slane %v362, %v427
    %v429 = vlaneseq
    %v430 = vshrl.u32 %v429, 7
    %v431 = vsub.s32 0, %v430
    %v432 = vrot.slane %v364, %v431
    %v433 = vlaneseq
    %v434 = vshrl.u32 %v433, 7
    %v435 = vsub.s32 0, %v434
    %v436 = vrot.slane %v347, %v435
    %v437 = vlaneseq
    %v438 = vshrl.u32 %v437, 7
    %v439 = vsub.s32 0, %v438
    %v440 = vrot.slane %v361, %v439
    %v441 = vlaneseq
    %v442 = vshrl.u32 %v441, 7
    %v443 = vsub.s32 0, %v442
    %v444 = vrot.slane %v363, %v443
    %v445 = vlaneseq
    %v446 = vshrl.u32 %v445, 7
    %v447 = vsub.s32 0, %v446
    %v448 = vrot.slane %v365, %v447
    %v449 = vlaneseq
    %v450 = vshrl.u32 %v449, 7
    %v451 = vsub.s32 0, %v450
    %v452 = vrot.slane %v389, %v451
    %v453 = vlaneseq
    %v454 = vshrl.u32 %v453, 7
    %v455 = vsub.s32 0, %v454
    %v456 = vrot.slane %v403, %v455
    %v457 = vlaneseq
    %v458 = vshrl.u32 %v457, 7
    %v459 = vsub.s32 0, %v458
    %v460 = vrot.slane %v411, %v459
    %v461 = vlaneseq
    %v462 = vshrl.u32 %v461, 7
    %v463 = vsub.s32 0, %v462
    %v464 = vrot.slane %v413, %v463
    %v465 = vlaneseq
    %v466 = vshrl.u32 %v465, 7
    %v467 = vsub.s32 0, %v466
    %v468 = vrot.slane %v396, %v467
    %v469 = vlaneseq
    %v470 = vshrl.u32 %v469, 7
    %v471 = vsub.s32 0, %v470
    %v472 = vrot.slane %v410, %v471
    %v473 = vlaneseq
    %v474 = vshrl.u32 %v473, 7
    %v475 = vsub.s32 0, %v474
    %v476 = vrot.slane %v412, %v475
    %v477 = vlaneseq
    %v478 = vshrl.u32 %v477, 7
    %v479 = vsub.s32 0, %v478
    %v480 = vrot.slane %v414, %v479
    %vm497 = vcmp.gt.f32.partialorder %v420, %v145
    %vm498 = vcmp.gt.f32.partialorder %v420, %v149
    %vm499 = vcmp.gt.f32.partialorder %v424, %v156
    %vm500 = vcmp.gt.f32.partialorder %v424, %v160
    %vm501 = vcmp.gt.f32.partialorder %v428, %v167
    %vm502 = vcmp.gt.f32.partialorder %v428, %v171
    %vm503 = vcmp.gt.f32.partialorder %v432, %v178
    %vm504 = vcmp.gt.f32.partialorder %v432, %v182
    %vm505 = vcmp.gt.f32.partialorder %v436, %v189
    %vm506 = vcmp.gt.f32.partialorder %v436, %v193
    %vm507 = vcmp.gt.f32.partialorder %v440, %v200
    %vm508 = vcmp.gt.f32.partialorder %v440, %v204
    %vm509 = vcmp.gt.f32.partialorder %v444, %v211
    %vm510 = vcmp.gt.f32.partialorder %v444, %v215
    %vm511 = vcmp.gt.f32.partialorder %v448, %v222
    %vm512 = vcmp.gt.f32.partialorder %v448, %v226
    %vm513 = vcmp.gt.f32.partialorder %v452, %v233
    %vm514 = vcmp.gt.f32.partialorder %v452, %v237
    %vm515 = vcmp.gt.f32.partialorder %v456, %v244
    %vm516 = vcmp.gt.f32.partialorder %v456, %v248
    %vm517 = vcmp.gt.f32.partialorder %v460, %v255
    %vm518 = vcmp.gt.f32.partialorder %v460, %v259
    %vm519 = vcmp.gt.f32.partialorder %v464, %v266
    %vm520 = vcmp.gt.f32.partialorder %v464, %v270
    %vm521 = vcmp.gt.f32.partialorder %v468, %v277
    %vm522 = vcmp.gt.f32.partialorder %v468, %v281
    %vm523 = vcmp.gt.f32.partialorder %v472, %v288
    %vm524 = vcmp.gt.f32.partialorder %v472, %v292
    %vm525 = vcmp.gt.f32.partialorder %v476, %v299
    %vm526 = vcmp.gt.f32.partialorder %v476, %v303
    %vm527 = vcmp.gt.f32.partialorder %v480, %v310
    %vm528 = vcmp.gt.f32.partialorder %v480, %v314
    %vm529 = vcmp.eq.f32.partialorder %v420, %v145
    %vm530 = vcmp.eq.f32.partialorder %v420, %v149
    %vm531 = vcmp.eq.f32.partialorder %v424, %v156
    %vm532 = vcmp.eq.f32.partialorder %v424, %v160
    %vm533 = vcmp.eq.f32.partialorder %v428, %v167
    %vm534 = vcmp.eq.f32.partialorder %v428, %v171
    %vm535 = vcmp.eq.f32.partialorder %v432, %v178
    %vm536 = vcmp.eq.f32.partialorder %v432, %v182
    %vm537 = vcmp.eq.f32.partialorder %v436, %v189
    %vm538 = vcmp.eq.f32.partialorder %v436, %v193
    %vm539 = vcmp.eq.f32.partialorder %v440, %v200
    %vm540 = vcmp.eq.f32.partialorder %v440, %v204
    %vm541 = vcmp.eq.f32.partialorder %v444, %v211
    %vm542 = vcmp.eq.f32.partialorder %v444, %v215
    %vm543 = vcmp.eq.f32.partialorder %v448, %v222
    %vm544 = vcmp.eq.f32.partialorder %v448, %v226
    %vm545 = vcmp.eq.f32.partialorder %v452, %v233
    %vm546 = vcmp.eq.f32.partialorder %v452, %v237
    %vm547 = vcmp.eq.f32.partialorder %v456, %v244
    %vm548 = vcmp.eq.f32.partialorder %v456, %v248
    %vm549 = vcmp.eq.f32.partialorder %v460, %v255
    %vm550 = vcmp.eq.f32.partialorder %v460, %v259
    %vm551 = vcmp.eq.f32.partialorder %v464, %v266
    %vm552 = vcmp.eq.f32.partialorder %v464, %v270
    %vm553 = vcmp.eq.f32.partialorder %v468, %v277
    %vm554 = vcmp.eq.f32.partialorder %v468, %v281
    %vm555 = vcmp.eq.f32.partialorder %v472, %v288
    %vm556 = vcmp.eq.f32.partialorder %v472, %v292
    %vm557 = vcmp.eq.f32.partialorder %v476, %v299
    %vm558 = vcmp.eq.f32.partialorder %v476, %v303
    %vm559 = vcmp.eq.f32.partialorder %v480, %v310
    %vm560 = vcmp.eq.f32.partialorder %v480, %v314
    %v561 = vsel %vm415, 1, 0
    %v562 = vsel %vm416, 1, 0
    %vm563 = vcmp.eq.s32.totalorder %v561, 1
    %vm564 = vcmp.eq.s32.totalorder %v562, 1
    %vm565 = vmand %vm529, %vm563
    %vm566 = vmand %vm530, %vm564
    %vm567 = vmand %vm531, %vm563
    %vm568 = vmand %vm532, %vm564
    %vm569 = vmand %vm533, %vm563
    %vm570 = vmand %vm534, %vm564
    %vm571 = vmand %vm535, %vm563
    %vm572 = vmand %vm536, %vm564
    %vm573 = vmand %vm537, %vm563
    %vm574 = vmand %vm538, %vm564
    %vm575 = vmand %vm539, %vm563
    %vm576 = vmand %vm540, %vm564
    %vm577 = vmand %vm541, %vm563
    %vm578 = vmand %vm542, %vm564
    %vm579 = vmand %vm543, %vm563
    %vm580 = vmand %vm544, %vm564
    %vm581 = vmand %vm545, %vm563
    %vm582 = vmand %vm546, %vm564
    %vm583 = vmand %vm547, %vm563
    %vm584 = vmand %vm548, %vm564
    %vm585 = vmand %vm549, %vm563
    %vm586 = vmand %vm550, %vm564
    %vm587 = vmand %vm551, %vm563
    %vm588 = vmand %vm552, %vm564
    %vm589 = vmand %vm553, %vm563
    %vm590 = vmand %vm554, %vm564
    %vm591 = vmand %vm555, %vm563
    %vm592 = vmand %vm556, %vm564
    %vm593 = vmand %vm557, %vm563
    %vm594 = vmand %vm558, %vm564
    %vm595 = vmand %vm559, %vm563
    %vm596 = vmand %vm560, %vm564
    %vm597 = vmor %vm497, %vm565
    %vm598 = vmor %vm498, %vm566
    %vm599 = vmor %vm499, %vm567
    %vm600 = vmor %vm500, %vm568
    %vm601 = vmor %vm501, %vm569
    %vm602 = vmor %vm502, %vm570
    %vm603 = vmor %vm503, %vm571
    %vm604 = vmor %vm504, %vm572
    %vm605 = vmor %vm505, %vm573
    %vm606 = vmor %vm506, %vm574
    %vm607 = vmor %vm507, %vm575
    %vm608 = vmor %vm508, %vm576
    %vm609 = vmor %vm509, %vm577
    %vm610 = vmor %vm510, %vm578
    %vm611 = vmor %vm511, %vm579
    %vm612 = vmor %vm512, %vm580
    %vm613 = vmor %vm513, %vm581
    %vm614 = vmor %vm514, %vm582
    %vm615 = vmor %vm515, %vm583
    %vm616 = vmor %vm516, %vm584
    %vm617 = vmor %vm517, %vm585
    %vm618 = vmor %vm518, %vm586
    %vm619 = vmor %vm519, %vm587
    %vm620 = vmor %vm520, %vm588
    %vm621 = vmor %vm521, %vm589
    %vm622 = vmor %vm522, %vm590
    %vm623 = vmor %vm523, %vm591
    %vm624 = vmor %vm524, %vm592
    %vm625 = vmor %vm525, %vm593
    %vm626 = vmor %vm526, %vm594
    %vm627 = vmor %vm527, %vm595
    %vm628 = vmor %vm528, %vm596
    %v629 = vsel %vm597, 1.0, 0.0
    %v630 = vsel %vm598, 1.0, 0.0
    %v631 = vsel %vm599, 1.0, 0.0
    %v632 = vsel %vm600, 1.0, 0.0
    %v633 = vsel %vm601, 1.0, 0.0
    %v634 = vsel %vm602, 1.0, 0.0
    %v635 = vsel %vm603, 1.0, 0.0
    %v636 = vsel %vm604, 1.0, 0.0
    %v637 = vsel %vm605, 1.0, 0.0
    %v638 = vsel %vm606, 1.0, 0.0
    %v639 = vsel %vm607, 1.0, 0.0
    %v640 = vsel %vm608, 1.0, 0.0
    %v641 = vsel %vm609, 1.0, 0.0
    %v642 = vsel %vm610, 1.0, 0.0
    %v643 = vsel %vm611, 1.0, 0.0
    %v644 = vsel %vm612, 1.0, 0.0
    %v645 = vsel %vm613, 1.0, 0.0
    %v646 = vsel %vm614, 1.0, 0.0
    %v647 = vsel %vm615, 1.0, 0.0
    %v648 = vsel %vm616, 1.0, 0.0
    %v649 = vsel %vm617, 1.0, 0.0
    %v650 = vsel %vm618, 1.0, 0.0
    %v651 = vsel %vm619, 1.0, 0.0
    %v652 = vsel %vm620, 1.0, 0.0
    %v653 = vsel %vm621, 1.0, 0.0
    %v654 = vsel %vm622, 1.0, 0.0
    %v655 = vsel %vm623, 1.0, 0.0
    %v656 = vsel %vm624, 1.0, 0.0
    %v657 = vsel %vm625, 1.0, 0.0
    %v658 = vsel %vm626, 1.0, 0.0
    %v659 = vsel %vm627, 1.0, 0.0
    %v660 = vsel %vm628, 1.0, 0.0
    %v661 = vsel %vm121, %v629, 0.0
    %662 = vadd.xlane.f32.xlu0 %v661
    %v663 = vpop.xlane.xlu0 %662
    %v664 = vsel %vm121, %v630, 0.0
    %665 = vadd.xlane.f32.xlu0 %v664
    %v666 = vpop.xlane.xlu0 %665
    %v667 = vsel %vm121, %v631, 0.0
    %668 = vadd.xlane.f32.xlu0 %v667
    %v669 = vpop.xlane.xlu0 %668
    %v670 = vsel %vm121, %v632, 0.0
    %671 = vadd.xlane.f32.xlu0 %v670
    %v672 = vpop.xlane.xlu0 %671
    %v673 = vsel %vm121, %v633, 0.0
    %674 = vadd.xlane.f32.xlu0 %v673
    %v675 = vpop.xlane.xlu0 %674
    %v676 = vsel %vm121, %v634, 0.0
    %677 = vadd.xlane.f32.xlu0 %v676
    %v678 = vpop.xlane.xlu0 %677
    %v679 = vsel %vm121, %v635, 0.0
    %680 = vadd.xlane.f32.xlu0 %v679
    %v681 = vpop.xlane.xlu0 %680
    %v682 = vsel %vm121, %v636, 0.0
    %683 = vadd.xlane.f32.xlu0 %v682
    %v684 = vpop.xlane.xlu0 %683
    %v685 = vsel %vm121, %v637, 0.0
    %686 = vadd.xlane.f32.xlu0 %v685
    %v687 = vpop.xlane.xlu0 %686
    %v688 = vsel %vm121, %v638, 0.0
    %689 = vadd.xlane.f32.xlu0 %v688
    %v690 = vpop.xlane.xlu0 %689
    %v691 = vsel %vm121, %v639, 0.0
    %692 = vadd.xlane.f32.xlu0 %v691
    %v693 = vpop.xlane.xlu0 %692
    %v694 = vsel %vm121, %v640, 0.0
    %695 = vadd.xlane.f32.xlu0 %v694
    %v696 = vpop.xlane.xlu0 %695
    %v697 = vsel %vm121, %v641, 0.0
    %698 = vadd.xlane.f32.xlu0 %v697
    %v699 = vpop.xlane.xlu0 %698
    %v700 = vsel %vm121, %v642, 0.0
    %701 = vadd.xlane.f32.xlu0 %v700
    %v702 = vpop.xlane.xlu0 %701
    %v703 = vsel %vm121, %v643, 0.0
    %704 = vadd.xlane.f32.xlu0 %v703
    %v705 = vpop.xlane.xlu0 %704
    %v706 = vsel %vm121, %v644, 0.0
    %707 = vadd.xlane.f32.xlu0 %v706
    %v708 = vpop.xlane.xlu0 %707
    %v709 = vsel %vm121, %v645, 0.0
    %710 = vadd.xlane.f32.xlu0 %v709
    %v711 = vpop.xlane.xlu0 %710
    %v712 = vsel %vm121, %v646, 0.0
    %713 = vadd.xlane.f32.xlu0 %v712
    %v714 = vpop.xlane.xlu0 %713
    %v715 = vsel %vm121, %v647, 0.0
    %716 = vadd.xlane.f32.xlu0 %v715
    %v717 = vpop.xlane.xlu0 %716
    %v718 = vsel %vm121, %v648, 0.0
    %719 = vadd.xlane.f32.xlu0 %v718
    %v720 = vpop.xlane.xlu0 %719
    %v721 = vsel %vm121, %v649, 0.0
    %722 = vadd.xlane.f32.xlu0 %v721
    %v723 = vpop.xlane.xlu0 %722
    %v724 = vsel %vm121, %v650, 0.0
    %725 = vadd.xlane.f32.xlu0 %v724
    %v726 = vpop.xlane.xlu0 %725
    %v727 = vsel %vm121, %v651, 0.0
    %728 = vadd.xlane.f32.xlu0 %v727
    %v729 = vpop.xlane.xlu0 %728
    %v730 = vsel %vm121, %v652, 0.0
    %731 = vadd.xlane.f32.xlu0 %v730
    %v732 = vpop.xlane.xlu0 %731
    %v733 = vsel %vm121, %v653, 0.0
    %734 = vadd.xlane.f32.xlu0 %v733
    %v735 = vpop.xlane.xlu0 %734
    %v736 = vsel %vm121, %v654, 0.0
    %737 = vadd.xlane.f32.xlu0 %v736
    %v738 = vpop.xlane.xlu0 %737
    %v739 = vsel %vm121, %v655, 0.0
    %740 = vadd.xlane.f32.xlu0 %v739
    %v741 = vpop.xlane.xlu0 %740
    %v742 = vsel %vm121, %v656, 0.0
    %743 = vadd.xlane.f32.xlu0 %v742
    %v744 = vpop.xlane.xlu0 %743
    %v745 = vsel %vm121, %v657, 0.0
    %746 = vadd.xlane.f32.xlu0 %v745
    %v747 = vpop.xlane.xlu0 %746
    %v748 = vsel %vm121, %v658, 0.0
    %749 = vadd.xlane.f32.xlu0 %v748
    %v750 = vpop.xlane.xlu0 %749
    %v751 = vsel %vm121, %v659, 0.0
    %752 = vadd.xlane.f32.xlu0 %v751
    %v753 = vpop.xlane.xlu0 %752
    %v754 = vsel %vm121, %v660, 0.0
    %755 = vadd.xlane.f32.xlu0 %v754
    %v756 = vpop.xlane.xlu0 %755
    %v757 = vadd.f32 %v663, 0.0
    %v758 = vadd.f32 %v666, 0.0
    %v759 = vadd.f32 %v669, 0.0
    %v760 = vadd.f32 %v672, 0.0
    %v761 = vadd.f32 %v675, 0.0
    %v762 = vadd.f32 %v678, 0.0
    %v763 = vadd.f32 %v681, 0.0
    %v764 = vadd.f32 %v684, 0.0
    %v765 = vadd.f32 %v687, 0.0
    %v766 = vadd.f32 %v690, 0.0
    %v767 = vadd.f32 %v693, 0.0
    %v768 = vadd.f32 %v696, 0.0
    %v769 = vadd.f32 %v699, 0.0
    %v770 = vadd.f32 %v702, 0.0
    %v771 = vadd.f32 %v705, 0.0
    %v772 = vadd.f32 %v708, 0.0
    %v773 = vadd.f32 %v711, 0.0
    %v774 = vadd.f32 %v714, 0.0
    %v775 = vadd.f32 %v717, 0.0
    %v776 = vadd.f32 %v720, 0.0
    %v777 = vadd.f32 %v723, 0.0
    %v778 = vadd.f32 %v726, 0.0
    %v779 = vadd.f32 %v729, 0.0
    %v780 = vadd.f32 %v732, 0.0
    %v781 = vadd.f32 %v735, 0.0
    %v782 = vadd.f32 %v738, 0.0
    %v783 = vadd.f32 %v741, 0.0
    %v784 = vadd.f32 %v744, 0.0
    %v785 = vadd.f32 %v747, 0.0
    %v786 = vadd.f32 %v750, 0.0
    %v787 = vadd.f32 %v753, 0.0
    %v788 = vadd.f32 %v756, 0.0
    %v789 = vsub.f32 %v757, 1.0
    %v790 = vsub.f32 %v758, 1.0
    %v791 = vsub.f32 %v759, 1.0
    %v792 = vsub.f32 %v760, 1.0
    %v793 = vsub.f32 %v761, 1.0
    %v794 = vsub.f32 %v762, 1.0
    %v795 = vsub.f32 %v763, 1.0
    %v796 = vsub.f32 %v764, 1.0
    %v797 = vsub.f32 %v765, 1.0
    %v798 = vsub.f32 %v766, 1.0
    %v799 = vsub.f32 %v767, 1.0
    %v800 = vsub.f32 %v768, 1.0
    %v801 = vsub.f32 %v769, 1.0
    %v802 = vsub.f32 %v770, 1.0
    %v803 = vsub.f32 %v771, 1.0
    %v804 = vsub.f32 %v772, 1.0
    %v805 = vsub.f32 %v773, 1.0
    %v806 = vsub.f32 %v774, 1.0
    %v807 = vsub.f32 %v775, 1.0
    %v808 = vsub.f32 %v776, 1.0
    %v809 = vsub.f32 %v777, 1.0
    %v810 = vsub.f32 %v778, 1.0
    %v811 = vsub.f32 %v779, 1.0
    %v812 = vsub.f32 %v780, 1.0
    %v813 = vsub.f32 %v781, 1.0
    %v814 = vsub.f32 %v782, 1.0
    %v815 = vsub.f32 %v783, 1.0
    %v816 = vsub.f32 %v784, 1.0
    %v817 = vsub.f32 %v785, 1.0
    %v818 = vsub.f32 %v786, 1.0
    %v819 = vsub.f32 %v787, 1.0
    %v820 = vsub.f32 %v788, 1.0
    %v821 = vsub.f32 0.0, %v789
    %v822 = vsub.f32 0.0, %v790
    %v823 = vsub.f32 0.0, %v791
    %v824 = vsub.f32 0.0, %v792
    %v825 = vsub.f32 0.0, %v793
    %v826 = vsub.f32 0.0, %v794
    %v827 = vsub.f32 0.0, %v795
    %v828 = vsub.f32 0.0, %v796
    %v829 = vsub.f32 0.0, %v797
    %v830 = vsub.f32 0.0, %v798
    %v831 = vsub.f32 0.0, %v799
    %v832 = vsub.f32 0.0, %v800
    %v833 = vsub.f32 0.0, %v801
    %v834 = vsub.f32 0.0, %v802
    %v835 = vsub.f32 0.0, %v803
    %v836 = vsub.f32 0.0, %v804
    %v837 = vsub.f32 0.0, %v805
    %v838 = vsub.f32 0.0, %v806
    %v839 = vsub.f32 0.0, %v807
    %v840 = vsub.f32 0.0, %v808
    %v841 = vsub.f32 0.0, %v809
    %v842 = vsub.f32 0.0, %v810
    %v843 = vsub.f32 0.0, %v811
    %v844 = vsub.f32 0.0, %v812
    %v845 = vsub.f32 0.0, %v813
    %v846 = vsub.f32 0.0, %v814
    %v847 = vsub.f32 0.0, %v815
    %v848 = vsub.f32 0.0, %v816
    %v849 = vsub.f32 0.0, %v817
    %v850 = vsub.f32 0.0, %v818
    %v851 = vsub.f32 0.0, %v819
    %v852 = vsub.f32 0.0, %v820
    %v853 = vmul.f32 %v821, 0.25
    %v854 = vmul.f32 %v822, 0.25
    %v855 = vmul.f32 %v823, 0.25
    %v856 = vmul.f32 %v824, 0.25
    %v857 = vmul.f32 %v825, 0.25
    %v858 = vmul.f32 %v826, 0.25
    %v859 = vmul.f32 %v827, 0.25
    %v860 = vmul.f32 %v828, 0.25
    %v861 = vmul.f32 %v829, 0.25
    %v862 = vmul.f32 %v830, 0.25
    %v863 = vmul.f32 %v831, 0.25
    %v864 = vmul.f32 %v832, 0.25
    %v865 = vmul.f32 %v833, 0.25
    %v866 = vmul.f32 %v834, 0.25
    %v867 = vmul.f32 %v835, 0.25
    %v868 = vmul.f32 %v836, 0.25
    %v869 = vmul.f32 %v837, 0.25
    %v870 = vmul.f32 %v838, 0.25
    %v871 = vmul.f32 %v839, 0.25
    %v872 = vmul.f32 %v840, 0.25
    %v873 = vmul.f32 %v841, 0.25
    %v874 = vmul.f32 %v842, 0.25
    %v875 = vmul.f32 %v843, 0.25
    %v876 = vmul.f32 %v844, 0.25
    %v877 = vmul.f32 %v845, 0.25
    %v878 = vmul.f32 %v846, 0.25
    %v879 = vmul.f32 %v847, 0.25
    %v880 = vmul.f32 %v848, 0.25
    %v881 = vmul.f32 %v849, 0.25
    %v882 = vmul.f32 %v850, 0.25
    %v883 = vmul.f32 %v851, 0.25
    %v884 = vmul.f32 %v852, 0.25
    %v885 = vmul.f32 %v853, 1.442695
    %v886 = vpow.pop %v885
    %v887 = vmul.f32 %v854, 1.442695
    %v888 = vpow.pop %v887
    %v889 = vmul.f32 %v855, 1.442695
    %v890 = vpow.pop %v889
    %v891 = vmul.f32 %v856, 1.442695
    %v892 = vpow.pop %v891
    %v893 = vmul.f32 %v857, 1.442695
    %v894 = vpow.pop %v893
    %v895 = vmul.f32 %v858, 1.442695
    %v896 = vpow.pop %v895
    %v897 = vmul.f32 %v859, 1.442695
    %v898 = vpow.pop %v897
    %v899 = vmul.f32 %v860, 1.442695
    %v900 = vpow.pop %v899
    %v901 = vmul.f32 %v861, 1.442695
    %v902 = vpow.pop %v901
    %v903 = vmul.f32 %v862, 1.442695
    %v904 = vpow.pop %v903
    %v905 = vmul.f32 %v863, 1.442695
    %v906 = vpow.pop %v905
    %v907 = vmul.f32 %v864, 1.442695
    %v908 = vpow.pop %v907
    %v909 = vmul.f32 %v865, 1.442695
    %v910 = vpow.pop %v909
    %v911 = vmul.f32 %v866, 1.442695
    %v912 = vpow.pop %v911
    %v913 = vmul.f32 %v867, 1.442695
    %v914 = vpow.pop %v913
    %v915 = vmul.f32 %v868, 1.442695
    %v916 = vpow.pop %v915
    %v917 = vmul.f32 %v869, 1.442695
    %v918 = vpow.pop %v917
    %v919 = vmul.f32 %v870, 1.442695
    %v920 = vpow.pop %v919
    %v921 = vmul.f32 %v871, 1.442695
    %v922 = vpow.pop %v921
    %v923 = vmul.f32 %v872, 1.442695
    %v924 = vpow.pop %v923
    %v925 = vmul.f32 %v873, 1.442695
    %v926 = vpow.pop %v925
    %v927 = vmul.f32 %v874, 1.442695
    %v928 = vpow.pop %v927
    %v929 = vmul.f32 %v875, 1.442695
    %v930 = vpow.pop %v929
    %v931 = vmul.f32 %v876, 1.442695
    %v932 = vpow.pop %v931
    %v933 = vmul.f32 %v877, 1.442695
    %v934 = vpow.pop %v933
    %v935 = vmul.f32 %v878, 1.442695
    %v936 = vpow.pop %v935
    %v937 = vmul.f32 %v879, 1.442695
    %v938 = vpow.pop %v937
    %v939 = vmul.f32 %v880, 1.442695
    %v940 = vpow.pop %v939
    %v941 = vmul.f32 %v881, 1.442695
    %v942 = vpow.pop %v941
    %v943 = vmul.f32 %v882, 1.442695
    %v944 = vpow.pop %v943
    %v945 = vmul.f32 %v883, 1.442695
    %v946 = vpow.pop %v945
    %v947 = vmul.f32 %v884, 1.442695
    %v948 = vpow.pop %v947
    %v981 = vlaneseq
    %v982 = vshrl.u32 %v981, 7
    %v983 = vsub.s32 %v128, %v982
    %v984 = vrot.slane %v886, %v983
    %v985 = vadd.s32 %v128, 4294967288
    %v986 = vlaneseq
    %v987 = vshrl.u32 %v986, 7
    %v988 = vsub.s32 %v985, %v987
    %v989 = vrot.slane %v888, %v988
    %vm990 = vcmask 130112
    %v991 = vsel %vm990, %v989, %v984
    %v992 = vlaneseq
    %v993 = vshrl.u32 %v992, 7
    %v994 = vsub.s32 %v128, %v993
    %v995 = vrot.slane %v890, %v994
    %v996 = vlaneseq
    %v997 = vshrl.u32 %v996, 7
    %v998 = vsub.s32 %v985, %v997
    %v999 = vrot.slane %v892, %v998
    %v1000 = vsel %vm990, %v999, %v995
    %v1001 = vlaneseq
    %v1002 = vshrl.u32 %v1001, 7
    %v1003 = vsub.s32 %v128, %v1002
    %v1004 = vrot.slane %v894, %v1003
    %v1005 = vlaneseq
    %v1006 = vshrl.u32 %v1005, 7
    %v1007 = vsub.s32 %v985, %v1006
    %v1008 = vrot.slane %v896, %v1007
    %v1009 = vsel %vm990, %v1008, %v1004
    %v1010 = vlaneseq
    %v1011 = vshrl.u32 %v1010, 7
    %v1012 = vsub.s32 %v128, %v1011
    %v1013 = vrot.slane %v898, %v1012
    %v1014 = vlaneseq
    %v1015 = vshrl.u32 %v1014, 7
    %v1016 = vsub.s32 %v985, %v1015
    %v1017 = vrot.slane %v900, %v1016
    %v1018 = vsel %vm990, %v1017, %v1013
    %v1019 = vlaneseq
    %v1020 = vshrl.u32 %v1019, 7
    %v1021 = vsub.s32 %v128, %v1020
    %v1022 = vrot.slane %v902, %v1021
    %v1023 = vlaneseq
    %v1024 = vshrl.u32 %v1023, 7
    %v1025 = vsub.s32 %v985, %v1024
    %v1026 = vrot.slane %v904, %v1025
    %v1027 = vsel %vm990, %v1026, %v1022
    %v1028 = vlaneseq
    %v1029 = vshrl.u32 %v1028, 7
    %v1030 = vsub.s32 %v128, %v1029
    %v1031 = vrot.slane %v906, %v1030
    %v1032 = vlaneseq
    %v1033 = vshrl.u32 %v1032, 7
    %v1034 = vsub.s32 %v985, %v1033
    %v1035 = vrot.slane %v908, %v1034
    %v1036 = vsel %vm990, %v1035, %v1031
    %v1037 = vlaneseq
    %v1038 = vshrl.u32 %v1037, 7
    %v1039 = vsub.s32 %v128, %v1038
    %v1040 = vrot.slane %v910, %v1039
    %v1041 = vlaneseq
    %v1042 = vshrl.u32 %v1041, 7
    %v1043 = vsub.s32 %v985, %v1042
    %v1044 = vrot.slane %v912, %v1043
    %v1045 = vsel %vm990, %v1044, %v1040
    %v1046 = vlaneseq
    %v1047 = vshrl.u32 %v1046, 7
    %v1048 = vsub.s32 %v128, %v1047
    %v1049 = vrot.slane %v914, %v1048
    %v1050 = vlaneseq
    %v1051 = vshrl.u32 %v1050, 7
    %v1052 = vsub.s32 %v985, %v1051
    %v1053 = vrot.slane %v916, %v1052
    %v1054 = vsel %vm990, %v1053, %v1049
    %v1055 = vlaneseq
    %v1056 = vshrl.u32 %v1055, 7
    %v1057 = vsub.s32 %v128, %v1056
    %v1058 = vrot.slane %v918, %v1057
    %v1059 = vlaneseq
    %v1060 = vshrl.u32 %v1059, 7
    %v1061 = vsub.s32 %v985, %v1060
    %v1062 = vrot.slane %v920, %v1061
    %v1063 = vsel %vm990, %v1062, %v1058
    %v1064 = vlaneseq
    %v1065 = vshrl.u32 %v1064, 7
    %v1066 = vsub.s32 %v128, %v1065
    %v1067 = vrot.slane %v922, %v1066
    %v1068 = vlaneseq
    %v1069 = vshrl.u32 %v1068, 7
    %v1070 = vsub.s32 %v985, %v1069
    %v1071 = vrot.slane %v924, %v1070
    %v1072 = vsel %vm990, %v1071, %v1067
    %v1073 = vlaneseq
    %v1074 = vshrl.u32 %v1073, 7
    %v1075 = vsub.s32 %v128, %v1074
    %v1076 = vrot.slane %v926, %v1075
    %v1077 = vlaneseq
    %v1078 = vshrl.u32 %v1077, 7
    %v1079 = vsub.s32 %v985, %v1078
    %v1080 = vrot.slane %v928, %v1079
    %v1081 = vsel %vm990, %v1080, %v1076
    %v1082 = vlaneseq
    %v1083 = vshrl.u32 %v1082, 7
    %v1084 = vsub.s32 %v128, %v1083
    %v1085 = vrot.slane %v930, %v1084
    %v1086 = vlaneseq
    %v1087 = vshrl.u32 %v1086, 7
    %v1088 = vsub.s32 %v985, %v1087
    %v1089 = vrot.slane %v932, %v1088
    %v1090 = vsel %vm990, %v1089, %v1085
    %v1091 = vlaneseq
    %v1092 = vshrl.u32 %v1091, 7
    %v1093 = vsub.s32 %v128, %v1092
    %v1094 = vrot.slane %v934, %v1093
    %v1095 = vlaneseq
    %v1096 = vshrl.u32 %v1095, 7
    %v1097 = vsub.s32 %v985, %v1096
    %v1098 = vrot.slane %v936, %v1097
    %v1099 = vsel %vm990, %v1098, %v1094
    %v1100 = vlaneseq
    %v1101 = vshrl.u32 %v1100, 7
    %v1102 = vsub.s32 %v128, %v1101
    %v1103 = vrot.slane %v938, %v1102
    %v1104 = vlaneseq
    %v1105 = vshrl.u32 %v1104, 7
    %v1106 = vsub.s32 %v985, %v1105
    %v1107 = vrot.slane %v940, %v1106
    %v1108 = vsel %vm990, %v1107, %v1103
    %v1109 = vlaneseq
    %v1110 = vshrl.u32 %v1109, 7
    %v1111 = vsub.s32 %v128, %v1110
    %v1112 = vrot.slane %v942, %v1111
    %v1113 = vlaneseq
    %v1114 = vshrl.u32 %v1113, 7
    %v1115 = vsub.s32 %v985, %v1114
    %v1116 = vrot.slane %v944, %v1115
    %v1117 = vsel %vm990, %v1116, %v1112
    %v1118 = vlaneseq
    %v1119 = vshrl.u32 %v1118, 7
    %v1120 = vsub.s32 %v128, %v1119
    %v1121 = vrot.slane %v946, %v1120
    %v1122 = vlaneseq
    %v1123 = vshrl.u32 %v1122, 7
    %v1124 = vsub.s32 %v985, %v1123
    %v1125 = vrot.slane %v948, %v1124
    %v1126 = vsel %vm990, %v1125, %v1121
    %vm1127 = vcmask 1041409
    %v1128 = vsel %vm1127, %v1000, %v991
    %vm1129 = vcmask 1042434
    %v1130 = vsel %vm1129, %v1009, %v1128
    %vm1131 = vcmask 1043459
    %v1132 = vsel %vm1131, %v1018, %v1130
    %vm1133 = vcmask 1044484
    %v1134 = vsel %vm1133, %v1027, %v1132
    %vm1135 = vcmask 1045509
    %v1136 = vsel %vm1135, %v1036, %v1134
    %vm1137 = vcmask 1046534
    %v1138 = vsel %vm1137, %v1045, %v1136
    %vm1139 = vcmask 1047559
    %v1140 = vsel %vm1139, %v1054, %v1138
    %v1141 = vsel %vm1127, %v1072, %v1063
    %v1142 = vsel %vm1129, %v1081, %v1141
    %v1143 = vsel %vm1131, %v1090, %v1142
    %v1144 = vsel %vm1133, %v1099, %v1143
    %v1145 = vsel %vm1135, %v1108, %v1144
    %v1146 = vsel %vm1137, %v1117, %v1145
    %v1147 = vsel %vm1139, %v1126, %v1146
    %v1150 = vmul.f32 %v137, %v1140
    %v1151 = vmul.f32 %v138, %v1147
    %v1152 = vsel %vm121, %v1150, 0.0
    %v1153 = vsel %vm121, %v1151, 0.0
    %v1154 = vadd.f32 %v1152, %v1153
    %1155 = vadd.xlane.f32.xlu0 %v1154
    %v1156 = vpop.xlane.xlu0 %1155
    %v1157 = vrot.slane %v1156, 4
    %v1158 = vadd.f32 %v1156, %v1157
    %v1159 = vrot.slane %v1158, 2
    %v1160 = vadd.f32 %v1158, %v1159
    %v1161 = vrot.slane %v1160, 1
    %v1162 = vadd.f32 %v1160, %v1161
    %s1163 = vtos %v1162
    %v1164 = vstv %s1163
    %v1165 = vadd.f32 %v1164, 0.0
    %1166 = vst [vmem:[#allocation6] sm:$0xff] %v1165
    // Predicated region
    $region10: #{tpu_custom_call.1} parent=1 // pred_check
      _
    $region11: #{tpu_custom_call.1} parent=1 // pred_check_branch
      %1168 = sbr.rel (0) target = $region13
    $region12: #{tpu_custom_call.1} parent=1 // pred_region
      %s1170 = ssub.s32 128, 128
      %1171 = vsyncadd [#allocation5], %s1170
      %s1173 = sshll.u32 [#allocation6], 4
      %s1174 = int_to_ptr.vmem [resolvable:$true] %s1173
      %1176 = dma.vmem_to_hbm [thread:$0]  %s1174, 128, %s1, [#allocation5]
    $region13: #{tpu_custom_call.1} parent=1 // pred_fallthru
      _
    // Predicated region
    $region14: #{tpu_custom_call.1} parent=1 // pred_check
      _
    $region15: #{tpu_custom_call.1} parent=1 // pred_check_branch
      %1178 = sbr.rel (0) target = $region17
    $region16: #{tpu_custom_call.1} parent=1 // pred_region
      %1179 = dma.done [#allocation5], 128
    $region17: #{tpu_custom_call.1} parent=1 // pred_fallthru
      _
    %1180 = vsyncpa [#allocation4], 1
    %1181 = vsyncpa [#allocation5], 1

</llo_original>
